<compile_context>
chip_gen: v7x
topology: tpu7x:2x2x1
jax: 0.10.0
libtpu: 0.0.40
codegen_flags: <defaults>
</compile_context>

<pallas_src>
import functools

import jax
import jax.numpy as jnp
from jax.experimental import pallas as pl
from jax.experimental.pallas import tpu as pltpu

HIDDEN = 768
LANE = 128
SUBLANE = 8


def _round_up(x, m):
    return (x + m - 1) // m * m


# ----------------------------------------------------------------------------
# Pallas kernel: fused (x @ W1 + b1) @ W2 + b2  for one (tile_m, :) row tile.
#   x_ref : (tile_m, K)        bf16
#   w1_ref: (K, 768)           bf16   (pre-transposed, resident across grid)
#   b1_ref: (1, 768)           f32
#   w2_ref: (768, N_pad)       bf16   (pre-transposed + lane-padded)
#   b2_ref: (1, N_pad)         f32
#   o_ref : (tile_m, N_pad)    f32
# The (tile_m, 768) intermediate `h` lives entirely in vregs/VMEM.
# ----------------------------------------------------------------------------
def _fused_kernel(x_ref, w1_ref, b1_ref, w2_ref, b2_ref, o_ref):
    h = jnp.dot(x_ref[...], w1_ref[...], preferred_element_type=jnp.float32)
    h = h + b1_ref[...]                       # bias add in f32 (v5e VPU has no bf16)
    h = h.astype(w2_ref.dtype)                # bf16 into the second MXU pass
    out = jnp.dot(h, w2_ref[...], preferred_element_type=jnp.float32)
    o_ref[...] = (out + b2_ref[...]).astype(o_ref.dtype)


def fused_forward_2d(x2d, w1, b1, w2, b2, *, tile_m=512):
    """x2d: (M, K) bf16. Returns (M, N_pad) f32 = (x2d @ w1 + b1) @ w2 + b2."""
    M, K = x2d.shape
    K1, H = w1.shape
    H2, n_pad = w2.shape
    assert K == K1 and H == HIDDEN and H2 == HIDDEN and n_pad % LANE == 0

    # cdiv-style tiling: shrink the tile for tiny M, round M up to the tile
    # instead of asserting divisibility.  tile_m stays a multiple of 8.
    tile_m = min(tile_m, _round_up(M, SUBLANE))
    m_pad = _round_up(M, tile_m)
    if m_pad != M:
        x2d = jnp.pad(x2d, ((0, m_pad - M), (0, 0)))

    grid = (m_pad // tile_m,)
    # VMEM per step (tile_m=512, K<=768, bf16 weights):
    #   x tile ~0.75 MB (x2 bufs), W1 ~1.2 MB, W2 ~0.2 MB, out tile ~0.25 MB (x2)
    # -> well under the 16/32 MiB scoped default on v5e/v6e/v7x.
    flops = 2 * m_pad * (K * HIDDEN + HIDDEN * n_pad)
    bytes_accessed = (
        x2d.size * x2d.dtype.itemsize
        + w1.size * w1.dtype.itemsize + b1.size * 4
        + w2.size * w2.dtype.itemsize + b2.size * 4
        + m_pad * n_pad * 4
    )
    out = pl.pallas_call(
        _fused_kernel,
        out_shape=jax.ShapeDtypeStruct((m_pad, n_pad), jnp.float32),
        grid_spec=pltpu.PrefetchScalarGridSpec(
            num_scalar_prefetch=0,
            grid=grid,
            in_specs=[
                pl.BlockSpec((tile_m, K), lambda i: (i, 0)),
                pl.BlockSpec((K, HIDDEN), lambda i: (0, 0)),
                pl.BlockSpec((1, HIDDEN), lambda i: (0, 0)),
                pl.BlockSpec((HIDDEN, n_pad), lambda i: (0, 0)),
                pl.BlockSpec((1, n_pad), lambda i: (0, 0)),
            ],
            out_specs=pl.BlockSpec((tile_m, n_pad), lambda i: (i, 0)),
        ),
        compiler_params=pltpu.CompilerParams(
            dimension_semantics=("parallel",),
        ),
        cost_estimate=pl.CostEstimate(
            flops=flops, transcendentals=0, bytes_accessed=bytes_accessed),
    )(x2d, w1, b1, w2, b2)
    return out[:M]


# ----------------------------------------------------------------------------
# Parameters (nn.Linear-style init, then stored kernel-ready:
#   pre-transposed (K, N), classifier lane-padded to 128, weights in bf16).
# ----------------------------------------------------------------------------
def init_linear_params(key, in_features, out_features, dtype=jnp.float32):
    kw, kb = jax.random.split(key)
    bound = 1.0 / jnp.sqrt(jnp.float32(in_features))
    w = jax.random.uniform(kw, (out_features, in_features), dtype, -bound, bound)
    b = jax.random.uniform(kb, (out_features,), dtype, -bound, bound)
    return w, b


def init_model_params(key, in_features, num_classes, compute_dtype=jnp.bfloat16):
    k_base, k_out = jax.random.split(key)
    # TODO(synk): the real WavLM base_model (conv feature extractor + transformer
    # encoder) is an external module; it is stubbed here as one linear D_in->768.
    base_w, base_b = init_linear_params(k_base, in_features, HIDDEN)
    out_w, out_b = init_linear_params(k_out, HIDDEN, num_classes)

    n_pad = _round_up(num_classes, LANE)
    w1 = base_w.T.astype(compute_dtype)                        # (D_in, 768)
    b1 = base_b.reshape(1, HIDDEN).astype(jnp.float32)         # (1, 768)
    w2 = jnp.zeros((HIDDEN, n_pad), compute_dtype)
    w2 = w2.at[:, :num_classes].set(out_w.T.astype(compute_dtype))   # (768, n_pad)
    b2 = jnp.zeros((1, n_pad), jnp.float32)
    b2 = b2.at[:, :num_classes].set(out_b.astype(jnp.float32))       # (1, n_pad)
    return {"w1": w1, "b1": b1, "w2": w2, "b2": b2}


# ----------------------------------------------------------------------------
# Forward (mirrors PhonemeRecognitionModel.forward, fused into one pallas_call)
# ----------------------------------------------------------------------------
@functools.partial(jax.jit, static_argnames=("num_classes",))
def phoneme_recognition_forward(params, x, *, num_classes):
    B, T, D = x.shape
    x2d = x.reshape(B * T, D).astype(params["w1"].dtype)       # bf16 activations
    out = fused_forward_2d(x2d, params["w1"], params["b1"],
                           params["w2"], params["b2"])
    return out[:, :num_classes].reshape(B, T, num_classes)     # (B, T, num_classes)


# ----------------------------------------------------------------------------
# Main
# ----------------------------------------------------------------------------
if __name__ == "__main__":
    key = jax.random.PRNGKey(0)
    k_params, k_x = jax.random.split(key)

    B, T, D_IN = 2, 8, 32          # small synthetic shapes
    NUM_CLASSES = 40               # e.g. phoneme vocabulary size

    params = init_model_params(k_params, D_IN, NUM_CLASSES)
    x = jax.random.normal(k_x, (B, T, D_IN), dtype=jnp.float32)

    out = phoneme_recognition_forward(params, x, num_classes=NUM_CLASSES)
    jax.block_until_ready(out)

    # Reference with the same bf16-input / f32-accumulate precision.
    xb = x.reshape(B * T, D_IN).astype(params["w1"].dtype)
    h_ref = jnp.dot(xb, params["w1"], preferred_element_type=jnp.float32) + params["b1"]
    hb = h_ref.astype(params["w2"].dtype)
    ref = jnp.dot(hb, params["w2"], preferred_element_type=jnp.float32) + params["b2"]
    ref = ref[:, :NUM_CLASSES].reshape(B, T, NUM_CLASSES)

    assert out.shape == (B, T, NUM_CLASSES), out.shape
    assert jnp.allclose(out, ref, atol=2e-3, rtol=2e-3), float(jnp.max(jnp.abs(out - ref)))

    print("KERNEL_OK")
</pallas_src>

<mosaic_0001>
module attributes {stable_mosaic.version = 11 : i64} {
  func.func @_fused_kernel(%arg0: i32, %arg1: memref<16x32xbf16, #tpu.memory_space<vmem>>, %arg2: memref<32x768xbf16, #tpu.memory_space<vmem>>, %arg3: memref<1x768xf32, #tpu.memory_space<vmem>>, %arg4: memref<768x128xbf16, #tpu.memory_space<vmem>>, %arg5: memref<1x128xf32, #tpu.memory_space<vmem>>, %arg6: memref<16x128xf32, #tpu.memory_space<vmem>>) attributes {dimension_semantics = [#tpu.dimension_semantics<parallel>], iteration_bounds = array<i64: 1>, scalar_prefetch = 0 : i64, scratch_operands = 0 : i64, tpu.core_type = #tpu.core_type<tc>, window_params = [{transform_indices = @transform_0, window_bounds = array<i64: 16, 32>}, {pipeline_mode = #tpu.pipeline_mode<synchronous>, transform_indices = @transform_1, window_bounds = array<i64: 32, 768>}, {pipeline_mode = #tpu.pipeline_mode<synchronous>, transform_indices = @transform_2, window_bounds = array<i64: 1, 768>}, {pipeline_mode = #tpu.pipeline_mode<synchronous>, transform_indices = @transform_3, window_bounds = array<i64: 768, 128>}, {pipeline_mode = #tpu.pipeline_mode<synchronous>, transform_indices = @transform_4, window_bounds = array<i64: 1, 128>}, {transform_indices = @transform_5, window_bounds = array<i64: 16, 128>}]} {
    %c0 = arith.constant 0 : index
    %c0_0 = arith.constant 0 : index
    %0 = vector.load %arg1[%c0, %c0_0] : memref<16x32xbf16, #tpu.memory_space<vmem>>, vector<16x32xbf16>
    %c0_1 = arith.constant 0 : index
    %c0_2 = arith.constant 0 : index
    %1 = vector.load %arg2[%c0_1, %c0_2] : memref<32x768xbf16, #tpu.memory_space<vmem>>, vector<32x768xbf16>
    %cst = arith.constant dense<0.000000e+00> : vector<16x768xf32>
    %2 = tpu.matmul %0, %1, %cst {dimension_numbers = #tpu.dot_dimension_numbers<[1], [0], [0], [1], [0, 0, 1, 1], [], []>} : vector<16x32xbf16>, vector<32x768xbf16>, vector<16x768xf32> -> vector<16x768xf32>
    %c0_3 = arith.constant 0 : index
    %c0_4 = arith.constant 0 : index
    %3 = vector.load %arg3[%c0_3, %c0_4] : memref<1x768xf32, #tpu.memory_space<vmem>>, vector<1x768xf32>
    %4 = vector.broadcast %3 : vector<1x768xf32> to vector<16x768xf32>
    %5 = arith.addf %2, %4 : vector<16x768xf32>
    %6 = arith.truncf %5 : vector<16x768xf32> to vector<16x768xbf16>
    %c0_5 = arith.constant 0 : index
    %c0_6 = arith.constant 0 : index
    %7 = vector.load %arg4[%c0_5, %c0_6] : memref<768x128xbf16, #tpu.memory_space<vmem>>, vector<768x128xbf16>
    %cst_7 = arith.constant dense<0.000000e+00> : vector<16x128xf32>
    %8 = tpu.matmul %6, %7, %cst_7 {dimension_numbers = #tpu.dot_dimension_numbers<[1], [0], [0], [1], [0, 0, 1, 1], [], []>} : vector<16x768xbf16>, vector<768x128xbf16>, vector<16x128xf32> -> vector<16x128xf32>
    %c0_8 = arith.constant 0 : index
    %c0_9 = arith.constant 0 : index
    %9 = vector.load %arg5[%c0_8, %c0_9] : memref<1x128xf32, #tpu.memory_space<vmem>>, vector<1x128xf32>
    %10 = vector.broadcast %9 : vector<1x128xf32> to vector<16x128xf32>
    %11 = arith.addf %8, %10 : vector<16x128xf32>
    %c0_10 = arith.constant 0 : index
    %c0_11 = arith.constant 0 : index
    %12 = vector.load %arg6[%c0_10, %c0_11] : memref<16x128xf32, #tpu.memory_space<vmem>>, vector<16x128xf32>
    tpu.vector_store %arg6[%c0_10, %c0_11], %11 {strides = array<i32>} : memref<16x128xf32, #tpu.memory_space<vmem>>, vector<16x128xf32>,
    return
  }
  func.func @transform_0(%arg0: i32) -> (i32, i32) {
    %c0_i32 = arith.constant 0 : i32
    %c0_i32_0 = arith.constant 0 : i32
    return %arg0, %c0_i32 : i32, i32
  }
  func.func @transform_1(%arg0: i32) -> (i32, i32) {
    %c0_i32 = arith.constant 0 : i32
    %c0_i32_0 = arith.constant 0 : i32
    %c0_i32_1 = arith.constant 0 : i32
    return %c0_i32, %c0_i32_0 : i32, i32
  }
  func.func @transform_2(%arg0: i32) -> (i32, i32) {
    %c0_i32 = arith.constant 0 : i32
    %c0_i32_0 = arith.constant 0 : i32
    %c0_i32_1 = arith.constant 0 : i32
    return %c0_i32, %c0_i32_0 : i32, i32
  }
  func.func @transform_3(%arg0: i32) -> (i32, i32) {
    %c0_i32 = arith.constant 0 : i32
    %c0_i32_0 = arith.constant 0 : i32
    %c0_i32_1 = arith.constant 0 : i32
    return %c0_i32, %c0_i32_0 : i32, i32
  }
  func.func @transform_4(%arg0: i32) -> (i32, i32) {
    %c0_i32 = arith.constant 0 : i32
    %c0_i32_0 = arith.constant 0 : i32
    %c0_i32_1 = arith.constant 0 : i32
    return %c0_i32, %c0_i32_0 : i32, i32
  }
  func.func @transform_5(%arg0: i32) -> (i32, i32) {
    %c0_i32 = arith.constant 0 : i32
    %c0_i32_0 = arith.constant 0 : i32
    return %arg0, %c0_i32 : i32, i32
  }
}

</mosaic_0001>

<llo_original>
// kernel: phoneme_recognition_forward.1
$region0: #{phoneme_recognition_forward.1}
  #allocation0 [shape = 'u32[]', space=smem, size = 0x4, offset = 0x4, fixed_abs, tag = 'smem constant byte address 0x4 - core index']
  #allocation1 [shape = 'u32[144,128]{1,0:T(1,128)}', space=vmem, size = 0x12000, scoped, tag = 'internal scratch']
  %s0 = inlined_call_operand.vmem [shape: bf16[16,32], index: 0, kind: input, shape index: {}]
  %s1 = inlined_call_operand.hbm [shape: bf16[32,768], index: 1, kind: input, shape index: {}]
  %s2 = inlined_call_operand.vmem [shape: f32[1,768], index: 2, kind: input, shape index: {}]
  %s3 = inlined_call_operand.hbm [shape: bf16[768,128], index: 3, kind: input, shape index: {}]
  %s4 = inlined_call_operand.vmem [shape: f32[1,128], index: 4, kind: input, shape index: {}]
  %s5 = inlined_call_operand.vmem [shape: f32[16,128], index: 5, kind: output, shape index: {}]
  %s6 = sld [smem:[#allocation0]]
  $region38: #{phoneme_recognition_forward.1} parent=0
    _
  %s8 = ssub.s32 1, %s6
  %s9 = scalar_select 0, %s8, %s6
  $region1: #{phoneme_recognition_forward.1} parent=0
    #allocation2 [shape = 'u8[49152]{0}', space=vmem, size = 0xc000, scoped, tag = 'input window, operand 1, single buffered']
    #allocation3 [shape = 's32[1]{0}', space=sflag, size = 0x4, scoped, tag = 'scoped memory for phoneme_recognition_forward.1']
    #allocation4 [shape = 'u8[196608]{0}', space=vmem, size = 0x30000, scoped, tag = 'input window, operand 3, single buffered']
    #allocation5 [shape = 's32[1]{0}', space=sflag, size = 0x4, scoped, tag = 'scoped memory for phoneme_recognition_forward.1']
    %10 = vsyncpa [#allocation3], 0
    %11 = vsyncpa [#allocation5], 0
    // Predicated region
    $region2: #{phoneme_recognition_forward.1} parent=1 // pred_check
      _
    $region3: #{phoneme_recognition_forward.1} parent=1 // pred_check_branch
      %13 = sbr.rel (0) target = $region5
    $region4: #{phoneme_recognition_forward.1} parent=1 // pred_region
      _
    $region5: #{phoneme_recognition_forward.1} parent=1 // pred_fallthru
      _
    // Predicated region
    $region6: #{phoneme_recognition_forward.1} parent=1 // pred_check
      _
    $region7: #{phoneme_recognition_forward.1} parent=1 // pred_check_branch
      %15 = sbr.rel (0) target = $region9
    $region8: #{phoneme_recognition_forward.1} parent=1 // pred_region
      %s17 = ssub.s32 1536, 1536
      %18 = vsyncadd [#allocation3], %s17
      %s19 = sshll.u32 [#allocation2], 4
      %s20 = int_to_ptr.vmem [resolvable:$true] %s19
      %25 = dma.hbm_to_vmem [thread:$0]  %s1, 1536, %s20, [#allocation3], 384, 384, 24
    $region9: #{phoneme_recognition_forward.1} parent=1 // pred_fallthru
      _
    // Predicated region
    $region10: #{phoneme_recognition_forward.1} parent=1 // pred_check
      _
    $region11: #{phoneme_recognition_forward.1} parent=1 // pred_check_branch
      %27 = sbr.rel (0) target = $region13
    $region12: #{phoneme_recognition_forward.1} parent=1 // pred_region
      _
    $region13: #{phoneme_recognition_forward.1} parent=1 // pred_fallthru
      _
    // Predicated region
    $region14: #{phoneme_recognition_forward.1} parent=1 // pred_check
      _
    $region15: #{phoneme_recognition_forward.1} parent=1 // pred_check_branch
      %29 = sbr.rel (0) target = $region17
    $region16: #{phoneme_recognition_forward.1} parent=1 // pred_region
      %s31 = ssub.s32 6144, 6144
      %32 = vsyncadd [#allocation5], %s31
      %s33 = sshll.u32 [#allocation4], 4
      %s34 = int_to_ptr.vmem [resolvable:$true] %s33
      %39 = dma.hbm_to_vmem [thread:$0]  %s3, 6144, %s34, [#allocation5], 64, 64, 4
    $region17: #{phoneme_recognition_forward.1} parent=1 // pred_fallthru
      _
    // Predicated region
    $region18: #{phoneme_recognition_forward.1} parent=1 // pred_check
      _
    $region19: #{phoneme_recognition_forward.1} parent=1 // pred_check_branch
      %41 = sbr.rel (0) target = $region21
    $region20: #{phoneme_recognition_forward.1} parent=1 // pred_region
      _
    $region21: #{phoneme_recognition_forward.1} parent=1 // pred_fallthru
      _
    // Predicated region
    $region22: #{phoneme_recognition_forward.1} parent=1 // pred_check
      _
    $region23: #{phoneme_recognition_forward.1} parent=1 // pred_check_branch
      %43 = sbr.rel (0) target = $region25
    $region24: #{phoneme_recognition_forward.1} parent=1 // pred_region
      %44 = dma.done [#allocation3], 1536
    $region25: #{phoneme_recognition_forward.1} parent=1 // pred_fallthru
      _
    // Predicated region
    $region26: #{phoneme_recognition_forward.1} parent=1 // pred_check
      _
    $region27: #{phoneme_recognition_forward.1} parent=1 // pred_check_branch
      %46 = sbr.rel (0) target = $region29
    $region28: #{phoneme_recognition_forward.1} parent=1 // pred_region
      %47 = dma.done [#allocation5], 6144
    $region29: #{phoneme_recognition_forward.1} parent=1 // pred_fallthru
      _
    %v49 = vld [vmem:[%s0] sm:$0xf]
    %v50 = vld [vmem:[%s0 + $0x4] sm:$0xf]
    %v51 = vld [vmem:[#allocation2] sm:$0xff]
    %v52 = vld [vmem:[#allocation2 + $0x8] sm:$0xff]
    %v53 = vld [vmem:[#allocation2 + $0x10] sm:$0xff]
    %v54 = vld [vmem:[#allocation2 + $0x18] sm:$0xff]
    %v55 = vld [vmem:[#allocation2 + $0x20] sm:$0xff]
    %v56 = vld [vmem:[#allocation2 + $0x28] sm:$0xff]
    %v57 = vld [vmem:[#allocation2 + $0x30] sm:$0xff]
    %v58 = vld [vmem:[#allocation2 + $0x38] sm:$0xff]
    %v59 = vld [vmem:[#allocation2 + $0x40] sm:$0xff]
    %v60 = vld [vmem:[#allocation2 + $0x48] sm:$0xff]
    %v61 = vld [vmem:[#allocation2 + $0x50] sm:$0xff]
    %v62 = vld [vmem:[#allocation2 + $0x58] sm:$0xff]
    %v63 = vld [vmem:[%s2] sm:$0x3f]
    %v65 = vlaneseq
    %v66 = vshrl.u32 %v65, 7
    %v67 = vsub.s32 0, %v66
    %v68 = vrot.slane %v63, %v67
    %v69 = vlaneseq
    %v70 = vshrl.u32 %v69, 7
    %v71 = vsub.s32 1, %v70
    %v72 = vrot.slane %v63, %v71
    %v73 = vlaneseq
    %v74 = vshrl.u32 %v73, 7
    %v75 = vsub.s32 2, %v74
    %v76 = vrot.slane %v63, %v75
    %v77 = vlaneseq
    %v78 = vshrl.u32 %v77, 7
    %v79 = vsub.s32 3, %v78
    %v80 = vrot.slane %v63, %v79
    %v81 = vlaneseq
    %v82 = vshrl.u32 %v81, 7
    %v83 = vsub.s32 4, %v82
    %v84 = vrot.slane %v63, %v83
    %v85 = vlaneseq
    %v86 = vshrl.u32 %v85, 7
    %v87 = vsub.s32 5, %v86
    %v88 = vrot.slane %v63, %v87
    %v97 = vunpack.c.l.b16 %v49
    %v98 = vunpack.c.l.b16 %v50
    %v99 = vpack.c.b16 %v98, %v97
    %v112 = vunpack.c.l.b16 %v51
    %v113 = vunpack.c.h.b16 %v51
    %v114 = vunpack.c.l.b16 %v52
    %v115 = vunpack.c.h.b16 %v52
    %v116 = vunpack.c.l.b16 %v53
    %v117 = vunpack.c.h.b16 %v53
    %v118 = vunpack.c.l.b16 %v54
    %v119 = vunpack.c.h.b16 %v54
    %v120 = vunpack.c.l.b16 %v55
    %v121 = vunpack.c.h.b16 %v55
    %v122 = vunpack.c.l.b16 %v56
    %v123 = vunpack.c.h.b16 %v56
    %v124 = vunpack.c.l.b16 %v57
    %v125 = vunpack.c.h.b16 %v57
    %v126 = vunpack.c.l.b16 %v58
    %v127 = vunpack.c.h.b16 %v58
    %v128 = vunpack.c.l.b16 %v59
    %v129 = vunpack.c.h.b16 %v59
    %v130 = vunpack.c.l.b16 %v60
    %v131 = vunpack.c.h.b16 %v60
    %v132 = vunpack.c.l.b16 %v61
    %v133 = vunpack.c.h.b16 %v61
    %v134 = vunpack.c.l.b16 %v62
    %v135 = vunpack.c.h.b16 %v62
    %v136 = vpack.c.b16 %v118, %v112
    %v137 = vpack.c.b16 %v119, %v113
    %v138 = vpack.c.b16 %v120, %v114
    %v139 = vpack.c.b16 %v121, %v115
    %v140 = vpack.c.b16 %v122, %v116
    %v141 = vpack.c.b16 %v123, %v117
    %v142 = vpack.c.b16 %v130, %v124
    %v143 = vpack.c.b16 %v131, %v125
    %v144 = vpack.c.b16 %v132, %v126
    %v145 = vpack.c.b16 %v133, %v127
    %v146 = vpack.c.b16 %v134, %v128
    %v147 = vpack.c.b16 %v135, %v129
    %vm160 = vcmask 261120
    %v162 = vsel %vm160, %v99, 0
    %164 = vmatprep.subr.bf16.mxu0 %v137
    %165 = vmatpush1.bf16.msra.mxu0 %v136
    %166 = vmatprep.subr.bf16.mxu0 %v143
    %167 = vmatpush1.bf16.msra.mxu0 %v142
    %168 = vmatprep.subr.bf16.mxu0 0
    %169 = vmatpush1.bf16.msra.mxu0 0
    %170 = vmatprep.subr.bf16.mxu0 0
    %171 = vmatpush1.bf16.msra.mxu0 0
    %172 = vmatprep.subr.bf16.mxu0 0
    %173 = vmatpush1.bf16.msra.mxu0 0
    %174 = vmatprep.subr.bf16.mxu0 0
    %175 = vmatpush1.bf16.msra.mxu0 0
    %176 = vmatprep.subr.bf16.mxu0 0
    %177 = vmatpush1.bf16.msra.mxu0 0
    %178 = vmatprep.subr.bf16.mxu0 0
    %179 = vmatpush1.bf16.msra.mxu0 0
    %180 = vmatprep.subr.bf16.mxu0 0
    %181 = vmatpush1.bf16.msra.mxu0 0
    %182 = vmatprep.subr.bf16.mxu0 0
    %183 = vmatpush1.bf16.msra.mxu0 0
    %184 = vmatprep.subr.bf16.mxu0 0
    %185 = vmatpush1.bf16.msra.mxu0 0
    %186 = vmatprep.subr.bf16.mxu0 0
    %187 = vmatpush1.bf16.msra.mxu0 0
    %188 = vmatprep.subr.bf16.mxu0 0
    %189 = vmatpush1.bf16.msra.mxu0 0
    %190 = vmatprep.subr.bf16.mxu0 0
    %191 = vmatpush1.bf16.msra.mxu0 0
    %192 = vmatprep.subr.bf16.mxu0 0
    %193 = vmatpush1.bf16.msra.mxu0 0
    %194 = vmatprep.subr.bf16.mxu0 0
    %195 = vmatpush1.bf16.msra.mxu0 0
    %196 = vmatprep.mubr.bf16.mxu0 0
    %197 = vmatmul.mubr.bf16.gmra.mrb[0].mxu0 %v162
    %v198 = vpop.f32.mrb[0].mxu0
    %v199 = vadd.f32 %v68, %v198
    %v200 = vpop.f32.mrb[0].mxu0
    %v201 = vadd.f32 %v72, %v200
    %v202 = vpop.f32.mrb[0].mxu0
    %v203 = vadd.f32 %v68, %v202
    %v204 = vpop.f32.mrb[0].mxu0
    %v205 = vadd.f32 %v72, %v204
    %206 = vdwg.mxu0
    %207 = vmatprep.subr.bf16.mxu0 %v139
    %208 = vmatpush1.bf16.msra.mxu0 %v138
    %209 = vmatprep.subr.bf16.mxu0 %v145
    %210 = vmatpush1.bf16.msra.mxu0 %v144
    %211 = vmatprep.subr.bf16.mxu0 0
    %212 = vmatpush1.bf16.msra.mxu0 0
    %213 = vmatprep.subr.bf16.mxu0 0
    %214 = vmatpush1.bf16.msra.mxu0 0
    %215 = vmatprep.subr.bf16.mxu0 0
    %216 = vmatpush1.bf16.msra.mxu0 0
    %217 = vmatprep.subr.bf16.mxu0 0
    %218 = vmatpush1.bf16.msra.mxu0 0
    %219 = vmatprep.subr.bf16.mxu0 0
    %220 = vmatpush1.bf16.msra.mxu0 0
    %221 = vmatprep.subr.bf16.mxu0 0
    %222 = vmatpush1.bf16.msra.mxu0 0
    %223 = vmatprep.subr.bf16.mxu0 0
    %224 = vmatpush1.bf16.msra.mxu0 0
    %225 = vmatprep.subr.bf16.mxu0 0
    %226 = vmatpush1.bf16.msra.mxu0 0
    %227 = vmatprep.subr.bf16.mxu0 0
    %228 = vmatpush1.bf16.msra.mxu0 0
    %229 = vmatprep.subr.bf16.mxu0 0
    %230 = vmatpush1.bf16.msra.mxu0 0
    %231 = vmatprep.subr.bf16.mxu0 0
    %232 = vmatpush1.bf16.msra.mxu0 0
    %233 = vmatprep.subr.bf16.mxu0 0
    %234 = vmatpush1.bf16.msra.mxu0 0
    %235 = vmatprep.subr.bf16.mxu0 0
    %236 = vmatpush1.bf16.msra.mxu0 0
    %237 = vmatprep.subr.bf16.mxu0 0
    %238 = vmatpush1.bf16.msra.mxu0 0
    %239 = vmatprep.mubr.bf16.mxu0 0
    %240 = vmatmul.mubr.bf16.gmra.mrb[0].mxu0 %v162
    %v241 = vpop.f32.mrb[0].mxu0
    %v242 = vadd.f32 %v76, %v241
    %v243 = vpop.f32.mrb[0].mxu0
    %v244 = vadd.f32 %v80, %v243
    %v245 = vpop.f32.mrb[0].mxu0
    %v246 = vadd.f32 %v76, %v245
    %v247 = vpop.f32.mrb[0].mxu0
    %v248 = vadd.f32 %v80, %v247
    %249 = vdwg.mxu0
    %250 = vmatprep.subr.bf16.mxu0 %v141
    %251 = vmatpush1.bf16.msra.mxu0 %v140
    %252 = vmatprep.subr.bf16.mxu0 %v147
    %253 = vmatpush1.bf16.msra.mxu0 %v146
    %254 = vmatprep.subr.bf16.mxu0 0
    %255 = vmatpush1.bf16.msra.mxu0 0
    %256 = vmatprep.subr.bf16.mxu0 0
    %257 = vmatpush1.bf16.msra.mxu0 0
    %258 = vmatprep.subr.bf16.mxu0 0
    %259 = vmatpush1.bf16.msra.mxu0 0
    %260 = vmatprep.subr.bf16.mxu0 0
    %261 = vmatpush1.bf16.msra.mxu0 0
    %262 = vmatprep.subr.bf16.mxu0 0
    %263 = vmatpush1.bf16.msra.mxu0 0
    %264 = vmatprep.subr.bf16.mxu0 0
    %265 = vmatpush1.bf16.msra.mxu0 0
    %266 = vmatprep.subr.bf16.mxu0 0
    %267 = vmatpush1.bf16.msra.mxu0 0
    %268 = vmatprep.subr.bf16.mxu0 0
    %269 = vmatpush1.bf16.msra.mxu0 0
    %270 = vmatprep.subr.bf16.mxu0 0
    %271 = vmatpush1.bf16.msra.mxu0 0
    %272 = vmatprep.subr.bf16.mxu0 0
    %273 = vmatpush1.bf16.msra.mxu0 0
    %274 = vmatprep.subr.bf16.mxu0 0
    %275 = vmatpush1.bf16.msra.mxu0 0
    %276 = vmatprep.subr.bf16.mxu0 0
    %277 = vmatpush1.bf16.msra.mxu0 0
    %278 = vmatprep.subr.bf16.mxu0 0
    %279 = vmatpush1.bf16.msra.mxu0 0
    %280 = vmatprep.subr.bf16.mxu0 0
    %281 = vmatpush1.bf16.msra.mxu0 0
    %282 = vmatprep.mubr.bf16.mxu0 0
    %283 = vmatmul.mubr.bf16.gmra.mrb[0].mxu0 %v162
    %v284 = vpop.f32.mrb[0].mxu0
    %v285 = vadd.f32 %v84, %v284
    %v286 = vpop.f32.mrb[0].mxu0
    %v287 = vadd.f32 %v88, %v286
    %v288 = vpop.f32.mrb[0].mxu0
    %v289 = vadd.f32 %v84, %v288
    %v290 = vpop.f32.mrb[0].mxu0
    %v291 = vadd.f32 %v88, %v290
    %292 = vdwg.mxu0
    %v293 = vpack.c.bf16 %v203, %v199
    %v294 = vpack.c.bf16 %v205, %v201
    %v295 = vpack.c.bf16 %v246, %v242
    %v296 = vpack.c.bf16 %v248, %v244
    %v297 = vpack.c.bf16 %v289, %v285
    %v298 = vpack.c.bf16 %v291, %v287
    %v299 = vld [vmem:[#allocation4] sm:$0xf]
    %v300 = vld [vmem:[#allocation4 + $0x4] sm:$0xf]
    %v301 = vld [vmem:[#allocation4 + $0x8] sm:$0xf]
    %v302 = vld [vmem:[#allocation4 + $0xc] sm:$0xf]
    %v303 = vld [vmem:[#allocation4 + $0x10] sm:$0xf]
    %v304 = vld [vmem:[#allocation4 + $0x14] sm:$0xf]
    %v305 = vld [vmem:[#allocation4 + $0x18] sm:$0xf]
    %v306 = vld [vmem:[#allocation4 + $0x1c] sm:$0xf]
    %v307 = vld [vmem:[#allocation4 + $0x20] sm:$0xf]
    %v308 = vld [vmem:[#allocation4 + $0x24] sm:$0xf]
    %v309 = vld [vmem:[#allocation4 + $0x28] sm:$0xf]
    %v310 = vld [vmem:[#allocation4 + $0x2c] sm:$0xf]
    %v311 = vld [vmem:[#allocation4 + $0x30] sm:$0xf]
    %v312 = vld [vmem:[#allocation4 + $0x34] sm:$0xf]
    %v313 = vld [vmem:[#allocation4 + $0x38] sm:$0xf]
    %v314 = vld [vmem:[#allocation4 + $0x3c] sm:$0xf]
    %v315 = vld [vmem:[#allocation4 + $0x40] sm:$0xf]
    %v316 = vld [vmem:[#allocation4 + $0x44] sm:$0xf]
    %v317 = vld [vmem:[#allocation4 + $0x48] sm:$0xf]
    %v318 = vld [vmem:[#allocation4 + $0x4c] sm:$0xf]
    %v319 = vld [vmem:[#allocation4 + $0x50] sm:$0xf]
    %v320 = vld [vmem:[#allocation4 + $0x54] sm:$0xf]
    %v321 = vld [vmem:[#allocation4 + $0x58] sm:$0xf]
    %v322 = vld [vmem:[#allocation4 + $0x5c] sm:$0xf]
    %v323 = vld [vmem:[#allocation4 + $0x60] sm:$0xf]
    %v324 = vld [vmem:[#allocation4 + $0x64] sm:$0xf]
    %v325 = vld [vmem:[#allocation4 + $0x68] sm:$0xf]
    %v326 = vld [vmem:[#allocation4 + $0x6c] sm:$0xf]
    %v327 = vld [vmem:[#allocation4 + $0x70] sm:$0xf]
    %v328 = vld [vmem:[#allocation4 + $0x74] sm:$0xf]
    %v329 = vld [vmem:[#allocation4 + $0x78] sm:$0xf]
    %v330 = vld [vmem:[#allocation4 + $0x7c] sm:$0xf]
    %v331 = vld [vmem:[#allocation4 + $0x80] sm:$0xf]
    %v332 = vld [vmem:[#allocation4 + $0x84] sm:$0xf]
    %v333 = vld [vmem:[#allocation4 + $0x88] sm:$0xf]
    %v334 = vld [vmem:[#allocation4 + $0x8c] sm:$0xf]
    %v335 = vld [vmem:[#allocation4 + $0x90] sm:$0xf]
    %v336 = vld [vmem:[#allocation4 + $0x94] sm:$0xf]
    %v337 = vld [vmem:[#allocation4 + $0x98] sm:$0xf]
    %v338 = vld [vmem:[#allocation4 + $0x9c] sm:$0xf]
    %v339 = vld [vmem:[#allocation4 + $0xa0] sm:$0xf]
    %v340 = vld [vmem:[#allocation4 + $0xa4] sm:$0xf]
    %v341 = vld [vmem:[#allocation4 + $0xa8] sm:$0xf]
    %v342 = vld [vmem:[#allocation4 + $0xac] sm:$0xf]
    %v343 = vld [vmem:[#allocation4 + $0xb0] sm:$0xf]
    %v344 = vld [vmem:[#allocation4 + $0xb4] sm:$0xf]
    %v345 = vld [vmem:[#allocation4 + $0xb8] sm:$0xf]
    %v346 = vld [vmem:[#allocation4 + $0xbc] sm:$0xf]
    %v347 = vld [vmem:[#allocation4 + $0xc0] sm:$0xf]
    %v348 = vld [vmem:[#allocation4 + $0xc4] sm:$0xf]
    %v349 = vld [vmem:[#allocation4 + $0xc8] sm:$0xf]
    %v350 = vld [vmem:[#allocation4 + $0xcc] sm:$0xf]
    %v351 = vld [vmem:[#allocation4 + $0xd0] sm:$0xf]
    %v352 = vld [vmem:[#allocation4 + $0xd4] sm:$0xf]
    %v353 = vld [vmem:[#allocation4 + $0xd8] sm:$0xf]
    %v354 = vld [vmem:[#allocation4 + $0xdc] sm:$0xf]
    %v355 = vld [vmem:[#allocation4 + $0xe0] sm:$0xf]
    %v356 = vld [vmem:[#allocation4 + $0xe4] sm:$0xf]
    %v357 = vld [vmem:[#allocation4 + $0xe8] sm:$0xf]
    %v358 = vld [vmem:[#allocation4 + $0xec] sm:$0xf]
    %v359 = vld [vmem:[#allocation4 + $0xf0] sm:$0xf]
    %v360 = vld [vmem:[#allocation4 + $0xf4] sm:$0xf]
    %v361 = vld [vmem:[#allocation4 + $0xf8] sm:$0xf]
    %v362 = vld [vmem:[#allocation4 + $0xfc] sm:$0xf]
    %v363 = vld [vmem:[#allocation4 + $0x100] sm:$0xf]
    %v364 = vld [vmem:[#allocation4 + $0x104] sm:$0xf]
    %v365 = vld [vmem:[#allocation4 + $0x108] sm:$0xf]
    %v366 = vld [vmem:[#allocation4 + $0x10c] sm:$0xf]
    %v367 = vld [vmem:[#allocation4 + $0x110] sm:$0xf]
    %v368 = vld [vmem:[#allocation4 + $0x114] sm:$0xf]
    %v369 = vld [vmem:[#allocation4 + $0x118] sm:$0xf]
    %v370 = vld [vmem:[#allocation4 + $0x11c] sm:$0xf]
    %v371 = vld [vmem:[#allocation4 + $0x120] sm:$0xf]
    %v372 = vld [vmem:[#allocation4 + $0x124] sm:$0xf]
    %v373 = vld [vmem:[#allocation4 + $0x128] sm:$0xf]
    %v374 = vld [vmem:[#allocation4 + $0x12c] sm:$0xf]
    %v375 = vld [vmem:[#allocation4 + $0x130] sm:$0xf]
    %v376 = vld [vmem:[#allocation4 + $0x134] sm:$0xf]
    %v377 = vld [vmem:[#allocation4 + $0x138] sm:$0xf]
    %v378 = vld [vmem:[#allocation4 + $0x13c] sm:$0xf]
    %v379 = vld [vmem:[#allocation4 + $0x140] sm:$0xf]
    %v380 = vld [vmem:[#allocation4 + $0x144] sm:$0xf]
    %v381 = vld [vmem:[#allocation4 + $0x148] sm:$0xf]
    %v382 = vld [vmem:[#allocation4 + $0x14c] sm:$0xf]
    %v383 = vld [vmem:[#allocation4 + $0x150] sm:$0xf]
    %v384 = vld [vmem:[#allocation4 + $0x154] sm:$0xf]
    %v385 = vld [vmem:[#allocation4 + $0x158] sm:$0xf]
    %v386 = vld [vmem:[#allocation4 + $0x15c] sm:$0xf]
    %v387 = vld [vmem:[#allocation4 + $0x160] sm:$0xf]
    %v388 = vld [vmem:[#allocation4 + $0x164] sm:$0xf]
    %v389 = vld [vmem:[#allocation4 + $0x168] sm:$0xf]
    %v390 = vld [vmem:[#allocation4 + $0x16c] sm:$0xf]
    %v391 = vld [vmem:[#allocation4 + $0x170] sm:$0xf]
    %v392 = vld [vmem:[#allocation4 + $0x174] sm:$0xf]
    %v393 = vld [vmem:[#allocation4 + $0x178] sm:$0xf]
    %v394 = vld [vmem:[#allocation4 + $0x17c] sm:$0xf]
    %v395 = vld [vmem:[%s4] sm:$0x1]
    %v397 = vlaneseq
    %v398 = vshrl.u32 %v397, 7
    %v399 = vsub.s32 0, %v398
    %v400 = vrot.slane %v395, %v399
    %v498 = vunpack.c.l.b16 %v299
    %v499 = vunpack.c.l.b16 %v300
    %v500 = vunpack.c.l.b16 %v301
    %v501 = vunpack.c.l.b16 %v302
    %v502 = vunpack.c.l.b16 %v303
    %v503 = vunpack.c.l.b16 %v304
    %v504 = vunpack.c.l.b16 %v305
    %v505 = vunpack.c.l.b16 %v306
    %v506 = vunpack.c.l.b16 %v307
    %v507 = vunpack.c.l.b16 %v308
    %v508 = vunpack.c.l.b16 %v309
    %v509 = vunpack.c.l.b16 %v310
    %v510 = vunpack.c.l.b16 %v311
    %v511 = vunpack.c.l.b16 %v312
    %v512 = vunpack.c.l.b16 %v313
    %v513 = vunpack.c.l.b16 %v314
    %v514 = vunpack.c.l.b16 %v315
    %v515 = vunpack.c.l.b16 %v316
    %v516 = vunpack.c.l.b16 %v317
    %v517 = vunpack.c.l.b16 %v318
    %v518 = vunpack.c.l.b16 %v319
    %v519 = vunpack.c.l.b16 %v320
    %v520 = vunpack.c.l.b16 %v321
    %v521 = vunpack.c.l.b16 %v322
    %v522 = vunpack.c.l.b16 %v323
    %v523 = vunpack.c.l.b16 %v324
    %v524 = vunpack.c.l.b16 %v325
    %v525 = vunpack.c.l.b16 %v326
    %v526 = vunpack.c.l.b16 %v327
    %v527 = vunpack.c.l.b16 %v328
    %v528 = vunpack.c.l.b16 %v329
    %v529 = vunpack.c.l.b16 %v330
    %v530 = vunpack.c.l.b16 %v331
    %v531 = vunpack.c.l.b16 %v332
    %v532 = vunpack.c.l.b16 %v333
    %v533 = vunpack.c.l.b16 %v334
    %v534 = vunpack.c.l.b16 %v335
    %v535 = vunpack.c.l.b16 %v336
    %v536 = vunpack.c.l.b16 %v337
    %v537 = vunpack.c.l.b16 %v338
    %v538 = vunpack.c.l.b16 %v339
    %v539 = vunpack.c.l.b16 %v340
    %v540 = vunpack.c.l.b16 %v341
    %v541 = vunpack.c.l.b16 %v342
    %v542 = vunpack.c.l.b16 %v343
    %v543 = vunpack.c.l.b16 %v344
    %v544 = vunpack.c.l.b16 %v345
    %v545 = vunpack.c.l.b16 %v346
    %v546 = vunpack.c.l.b16 %v347
    %v547 = vunpack.c.l.b16 %v348
    %v548 = vunpack.c.l.b16 %v349
    %v549 = vunpack.c.l.b16 %v350
    %v550 = vunpack.c.l.b16 %v351
    %v551 = vunpack.c.l.b16 %v352
    %v552 = vunpack.c.l.b16 %v353
    %v553 = vunpack.c.l.b16 %v354
    %v554 = vunpack.c.l.b16 %v355
    %v555 = vunpack.c.l.b16 %v356
    %v556 = vunpack.c.l.b16 %v357
    %v557 = vunpack.c.l.b16 %v358
    %v558 = vunpack.c.l.b16 %v359
    %v559 = vunpack.c.l.b16 %v360
    %v560 = vunpack.c.l.b16 %v361
    %v561 = vunpack.c.l.b16 %v362
    %v562 = vunpack.c.l.b16 %v363
    %v563 = vunpack.c.l.b16 %v364
    %v564 = vunpack.c.l.b16 %v365
    %v565 = vunpack.c.l.b16 %v366
    %v566 = vunpack.c.l.b16 %v367
    %v567 = vunpack.c.l.b16 %v368
    %v568 = vunpack.c.l.b16 %v369
    %v569 = vunpack.c.l.b16 %v370
    %v570 = vunpack.c.l.b16 %v371
    %v571 = vunpack.c.l.b16 %v372
    %v572 = vunpack.c.l.b16 %v373
    %v573 = vunpack.c.l.b16 %v374
    %v574 = vunpack.c.l.b16 %v375
    %v575 = vunpack.c.l.b16 %v376
    %v576 = vunpack.c.l.b16 %v377
    %v577 = vunpack.c.l.b16 %v378
    %v578 = vunpack.c.l.b16 %v379
    %v579 = vunpack.c.l.b16 %v380
    %v580 = vunpack.c.l.b16 %v381
    %v581 = vunpack.c.l.b16 %v382
    %v582 = vunpack.c.l.b16 %v383
    %v583 = vunpack.c.l.b16 %v384
    %v584 = vunpack.c.l.b16 %v385
    %v585 = vunpack.c.l.b16 %v386
    %v586 = vunpack.c.l.b16 %v387
    %v587 = vunpack.c.l.b16 %v388
    %v588 = vunpack.c.l.b16 %v389
    %v589 = vunpack.c.l.b16 %v390
    %v590 = vunpack.c.l.b16 %v391
    %v591 = vunpack.c.l.b16 %v392
    %v592 = vunpack.c.l.b16 %v393
    %v593 = vunpack.c.l.b16 %v394
    %v594 = vpack.c.b16 %v499, %v498
    %v595 = vpack.c.b16 %v501, %v500
    %v596 = vpack.c.b16 %v503, %v502
    %v597 = vpack.c.b16 %v505, %v504
    %v598 = vpack.c.b16 %v507, %v506
    %v599 = vpack.c.b16 %v509, %v508
    %v600 = vpack.c.b16 %v511, %v510
    %v601 = vpack.c.b16 %v513, %v512
    %v602 = vpack.c.b16 %v515, %v514
    %v603 = vpack.c.b16 %v517, %v516
    %v604 = vpack.c.b16 %v519, %v518
    %v605 = vpack.c.b16 %v521, %v520
    %v606 = vpack.c.b16 %v523, %v522
    %v607 = vpack.c.b16 %v525, %v524
    %v608 = vpack.c.b16 %v527, %v526
    %v609 = vpack.c.b16 %v529, %v528
    %v610 = vpack.c.b16 %v531, %v530
    %v611 = vpack.c.b16 %v533, %v532
    %v612 = vpack.c.b16 %v535, %v534
    %v613 = vpack.c.b16 %v537, %v536
    %v614 = vpack.c.b16 %v539, %v538
    %v615 = vpack.c.b16 %v541, %v540
    %v616 = vpack.c.b16 %v543, %v542
    %v617 = vpack.c.b16 %v545, %v544
    %v618 = vpack.c.b16 %v547, %v546
    %v619 = vpack.c.b16 %v549, %v548
    %v620 = vpack.c.b16 %v551, %v550
    %v621 = vpack.c.b16 %v553, %v552
    %v622 = vpack.c.b16 %v555, %v554
    %v623 = vpack.c.b16 %v557, %v556
    %v624 = vpack.c.b16 %v559, %v558
    %v625 = vpack.c.b16 %v561, %v560
    %v626 = vpack.c.b16 %v563, %v562
    %v627 = vpack.c.b16 %v565, %v564
    %v628 = vpack.c.b16 %v567, %v566
    %v629 = vpack.c.b16 %v569, %v568
    %v630 = vpack.c.b16 %v571, %v570
    %v631 = vpack.c.b16 %v573, %v572
    %v632 = vpack.c.b16 %v575, %v574
    %v633 = vpack.c.b16 %v577, %v576
    %v634 = vpack.c.b16 %v579, %v578
    %v635 = vpack.c.b16 %v581, %v580
    %v636 = vpack.c.b16 %v583, %v582
    %v637 = vpack.c.b16 %v585, %v584
    %v638 = vpack.c.b16 %v587, %v586
    %v639 = vpack.c.b16 %v589, %v588
    %v640 = vpack.c.b16 %v591, %v590
    %v641 = vpack.c.b16 %v593, %v592
    %690 = vmatprep.subr.bf16.mxu0 0
    %691 = vmatpush1.bf16.msra.mxu0 %v594
    %692 = vmatprep.subr.bf16.mxu0 0
    %693 = vmatpush1.bf16.msra.mxu0 %v595
    %694 = vmatprep.subr.bf16.mxu0 0
    %695 = vmatpush1.bf16.msra.mxu0 %v596
    %696 = vmatprep.subr.bf16.mxu0 0
    %697 = vmatpush1.bf16.msra.mxu0 %v597
    %698 = vmatprep.subr.bf16.mxu0 0
    %699 = vmatpush1.bf16.msra.mxu0 %v598
    %700 = vmatprep.subr.bf16.mxu0 0
    %701 = vmatpush1.bf16.msra.mxu0 %v599
    %702 = vmatprep.subr.bf16.mxu0 0
    %703 = vmatpush1.bf16.msra.mxu0 %v600
    %704 = vmatprep.subr.bf16.mxu0 0
    %705 = vmatpush1.bf16.msra.mxu0 %v601
    %706 = vmatprep.subr.bf16.mxu0 0
    %707 = vmatpush1.bf16.msra.mxu0 %v602
    %708 = vmatprep.subr.bf16.mxu0 0
    %709 = vmatpush1.bf16.msra.mxu0 %v603
    %710 = vmatprep.subr.bf16.mxu0 0
    %711 = vmatpush1.bf16.msra.mxu0 %v604
    %712 = vmatprep.subr.bf16.mxu0 0
    %713 = vmatpush1.bf16.msra.mxu0 %v605
    %714 = vmatprep.subr.bf16.mxu0 0
    %715 = vmatpush1.bf16.msra.mxu0 %v606
    %716 = vmatprep.subr.bf16.mxu0 0
    %717 = vmatpush1.bf16.msra.mxu0 %v607
    %718 = vmatprep.subr.bf16.mxu0 0
    %719 = vmatpush1.bf16.msra.mxu0 %v608
    %720 = vmatprep.subr.bf16.mxu0 0
    %721 = vmatpush1.bf16.msra.mxu0 %v609
    %722 = vmatprep.mubr.bf16.mxu0 %v294
    %723 = vmatmul.mubr.bf16.gmra.mrb[0].mxu0 %v293
    %v724 = vpop.f32.mrb[0].mxu0
    %v725 = vadd.f32 %v400, %v724
    %v726 = vpop.f32.mrb[0].mxu0
    %v727 = vpop.f32.mrb[0].mxu0
    %v728 = vadd.f32 %v400, %v727
    %v729 = vpop.f32.mrb[0].mxu0
    %730 = vdwg.mxu0
    %731 = vmatprep.subr.bf16.mxu0 0
    %732 = vmatpush1.bf16.msra.mxu0 %v610
    %733 = vmatprep.subr.bf16.mxu0 0
    %734 = vmatpush1.bf16.msra.mxu0 %v611
    %735 = vmatprep.subr.bf16.mxu0 0
    %736 = vmatpush1.bf16.msra.mxu0 %v612
    %737 = vmatprep.subr.bf16.mxu0 0
    %738 = vmatpush1.bf16.msra.mxu0 %v613
    %739 = vmatprep.subr.bf16.mxu0 0
    %740 = vmatpush1.bf16.msra.mxu0 %v614
    %741 = vmatprep.subr.bf16.mxu0 0
    %742 = vmatpush1.bf16.msra.mxu0 %v615
    %743 = vmatprep.subr.bf16.mxu0 0
    %744 = vmatpush1.bf16.msra.mxu0 %v616
    %745 = vmatprep.subr.bf16.mxu0 0
    %746 = vmatpush1.bf16.msra.mxu0 %v617
    %747 = vmatprep.subr.bf16.mxu0 0
    %748 = vmatpush1.bf16.msra.mxu0 %v618
    %749 = vmatprep.subr.bf16.mxu0 0
    %750 = vmatpush1.bf16.msra.mxu0 %v619
    %751 = vmatprep.subr.bf16.mxu0 0
    %752 = vmatpush1.bf16.msra.mxu0 %v620
    %753 = vmatprep.subr.bf16.mxu0 0
    %754 = vmatpush1.bf16.msra.mxu0 %v621
    %755 = vmatprep.subr.bf16.mxu0 0
    %756 = vmatpush1.bf16.msra.mxu0 %v622
    %757 = vmatprep.subr.bf16.mxu0 0
    %758 = vmatpush1.bf16.msra.mxu0 %v623
    %759 = vmatprep.subr.bf16.mxu0 0
    %760 = vmatpush1.bf16.msra.mxu0 %v624
    %761 = vmatprep.subr.bf16.mxu0 0
    %762 = vmatpush1.bf16.msra.mxu0 %v625
    %763 = vmatprep.mubr.bf16.mxu0 %v296
    %764 = vmatmul.mubr.bf16.gmra.mrb[0].mxu0 %v295
    %v765 = vpop.f32.mrb[0].mxu0
    %v766 = vadd.f32 %v725, %v765
    %v767 = vpop.f32.mrb[0].mxu0
    %v768 = vpop.f32.mrb[0].mxu0
    %v769 = vadd.f32 %v728, %v768
    %v770 = vpop.f32.mrb[0].mxu0
    %771 = vdwg.mxu0
    %772 = vmatprep.subr.bf16.mxu0 0
    %773 = vmatpush1.bf16.msra.mxu0 %v626
    %774 = vmatprep.subr.bf16.mxu0 0
    %775 = vmatpush1.bf16.msra.mxu0 %v627
    %776 = vmatprep.subr.bf16.mxu0 0
    %777 = vmatpush1.bf16.msra.mxu0 %v628
    %778 = vmatprep.subr.bf16.mxu0 0
    %779 = vmatpush1.bf16.msra.mxu0 %v629
    %780 = vmatprep.subr.bf16.mxu0 0
    %781 = vmatpush1.bf16.msra.mxu0 %v630
    %782 = vmatprep.subr.bf16.mxu0 0
    %783 = vmatpush1.bf16.msra.mxu0 %v631
    %784 = vmatprep.subr.bf16.mxu0 0
    %785 = vmatpush1.bf16.msra.mxu0 %v632
    %786 = vmatprep.subr.bf16.mxu0 0
    %787 = vmatpush1.bf16.msra.mxu0 %v633
    %788 = vmatprep.subr.bf16.mxu0 0
    %789 = vmatpush1.bf16.msra.mxu0 %v634
    %790 = vmatprep.subr.bf16.mxu0 0
    %791 = vmatpush1.bf16.msra.mxu0 %v635
    %792 = vmatprep.subr.bf16.mxu0 0
    %793 = vmatpush1.bf16.msra.mxu0 %v636
    %794 = vmatprep.subr.bf16.mxu0 0
    %795 = vmatpush1.bf16.msra.mxu0 %v637
    %796 = vmatprep.subr.bf16.mxu0 0
    %797 = vmatpush1.bf16.msra.mxu0 %v638
    %798 = vmatprep.subr.bf16.mxu0 0
    %799 = vmatpush1.bf16.msra.mxu0 %v639
    %800 = vmatprep.subr.bf16.mxu0 0
    %801 = vmatpush1.bf16.msra.mxu0 %v640
    %802 = vmatprep.subr.bf16.mxu0 0
    %803 = vmatpush1.bf16.msra.mxu0 %v641
    %804 = vmatprep.mubr.bf16.mxu0 %v298
    %805 = vmatmul.mubr.bf16.gmra.mrb[0].mxu0 %v297
    %v806 = vpop.f32.mrb[0].mxu0
    %v807 = vadd.f32 %v766, %v806
    %v808 = vpop.f32.mrb[0].mxu0
    %v809 = vpop.f32.mrb[0].mxu0
    %v810 = vadd.f32 %v769, %v809
    %v811 = vpop.f32.mrb[0].mxu0
    %812 = vdwg.mxu0
    %813 = vst [vmem:[%s5] sm:$0xff] %v807
    %814 = vst [vmem:[%s5 + $0x8] sm:$0xff] %v810
    // Predicated region
    $region30: #{phoneme_recognition_forward.1} parent=1 // pred_check
      _
    $region31: #{phoneme_recognition_forward.1} parent=1 // pred_check_branch
      %816 = sbr.rel (0) target = $region33
    $region32: #{phoneme_recognition_forward.1} parent=1 // pred_region
      _
    $region33: #{phoneme_recognition_forward.1} parent=1 // pred_fallthru
      _
    // Predicated region
    $region34: #{phoneme_recognition_forward.1} parent=1 // pred_check
      _
    $region35: #{phoneme_recognition_forward.1} parent=1 // pred_check_branch
      %818 = sbr.rel (0) target = $region37
    $region36: #{phoneme_recognition_forward.1} parent=1 // pred_region
      _
    $region37: #{phoneme_recognition_forward.1} parent=1 // pred_fallthru
      _
    %819 = vsyncpa [#allocation3], 1
    %820 = vsyncpa [#allocation5], 1

</llo_original>
